<compile_context>
chip_gen: v5e
topology: v5e:2x2
jax: 0.10.0
libtpu: 0.0.40
codegen_flags: <defaults>
</compile_context>

<pallas_src>
import functools
import math

import jax
import jax.numpy as jnp
from jax.experimental import pallas as pl
from jax.experimental.pallas import tpu as pltpu


# Soft budget for one (input tile + output tile) pair resident in VMEM.
# Pallas double-buffers each side, so steady-state footprint is ~2x this.
_PAIR_BUDGET_BYTES = 6 * 1024 * 1024
# Try to move at least this much per grid step (amortizes ~0.35us/step).
_TARGET_PAIR_BYTES = 2 * 1024 * 1024
# Scoped VMEM request: > 2x the pair budget, and within every generation's
# physical VMEM (v5e/v6e 128 MiB, v7x 64 MiB) and scoped defaults with headroom.
_VMEM_LIMIT_BYTES = 32 * 1024 * 1024


def _sublane(dtype) -> int:
    """Sublane packing requirement for the second-to-last axis."""
    itemsize = jnp.dtype(dtype).itemsize
    return max(8, 32 // max(1, itemsize))  # f32: 8, bf16: 16, int8/fp8: 32


def _cost(x) -> pl.CostEstimate:
    nbytes = x.size * jnp.dtype(x.dtype).itemsize
    return pl.CostEstimate(flops=0, transcendentals=0, bytes_accessed=2 * nbytes)


def _copy_kernel(x_ref, o_ref):
    # The permutation is fully expressed in the BlockSpec index maps;
    # the body is a straight VMEM copy.
    o_ref[...] = x_ref[...]


def _transpose_kernel(x_ref, o_ref, *, perm):
    # Small per-tile transpose (XLU / lane-sublane shuffles).
    o_ref[...] = jnp.transpose(x_ref[...], perm)


def _permute_copy_relayout(x: jax.Array, dims, k: int) -> jax.Array:
    """Permutation whose last k (>=2) axes are untouched: DMA-only relayout."""
    n = x.ndim
    shape = x.shape
    itemsize = jnp.dtype(x.dtype).itemsize
    out_shape = tuple(shape[d] for d in dims)

    inv = [0] * n
    for j, d in enumerate(dims):
        inv[d] = j

    lead = n - k                 # permuted leading axes (grid, block size 1)
    suffix = shape[lead:]        # unchanged trailing axes (kept whole or tiled)
    suffix_bytes = math.prod(suffix) * itemsize

    # Tile the outermost suffix axis if a full suffix slab would blow the
    # VMEM budget (keeps this path safe on v7x's 64 MiB / v5e's 16 MiB scoped).
    t = suffix[0]
    tile_suffix = False
    if 2 * suffix_bytes > _PAIR_BUDGET_BYTES:
        r = _sublane(x.dtype) if k == 2 else 1   # axis n-k is the sublane axis iff k == 2
        row_pair = 2 * math.prod(suffix[1:]) * itemsize
        t = (_PAIR_BUDGET_BYTES // max(1, row_pair)) // r * r
        t = min(max(t, r), suffix[0])
        tile_suffix = t != suffix[0]

    block = (1,) * lead + (t,) + tuple(suffix[1:])
    grid = tuple(out_shape[:lead])
    if tile_suffix:
        grid = grid + (pl.cdiv(suffix[0], t),)

    def out_index_map(*g):
        idx = [0] * n
        for j in range(lead):
            idx[j] = g[j]
        if tile_suffix:
            idx[lead] = g[lead]
        return tuple(idx)

    def in_index_map(*g):
        idx = [0] * n
        for a in range(lead):
            idx[a] = g[inv[a]]
        if tile_suffix:
            idx[lead] = g[lead]
        return tuple(idx)

    return pl.pallas_call(
        _copy_kernel,
        out_shape=jax.ShapeDtypeStruct(out_shape, x.dtype),
        grid_spec=pltpu.PrefetchScalarGridSpec(
            num_scalar_prefetch=0,
            grid=grid,
            in_specs=[pl.BlockSpec(block, in_index_map)],
            out_specs=pl.BlockSpec(block, out_index_map),
        ),
        compiler_params=pltpu.CompilerParams(
            dimension_semantics=("parallel",) * len(grid),
            vmem_limit_bytes=_VMEM_LIMIT_BYTES,
        ),
        cost_estimate=_cost(x),
    )(x)


def _permute_transpose(x: jax.Array, dims) -> jax.Array:
    """General permutation: tiled per-block transpose inside the kernel."""
    n = x.ndim
    shape = x.shape
    itemsize = jnp.dtype(x.dtype).itemsize
    out_shape = tuple(shape[d] for d in dims)
    sub = _sublane(x.dtype)

    # Leading identity prefix (batch-like axes). Since dims is neither the
    # identity nor ends with an identity suffix >= 2, p <= n - 2 here.
    p = 0
    while p < n and dims[p] == p:
        p += 1

    inner_axes = list(range(p, n))
    inner_elems = math.prod(shape[p:])

    def _align_req(a: int) -> int:
        # Tile size along axis `a` must be a multiple of this (or the full
        # dim) so both the input and output blocks stay (sublane, lane)
        # aligned at their last-two positions.
        j = dims.index(a)
        r = 1
        for pos in (a, j):
            if pos == n - 1:
                r = max(r, 128)
            elif pos == n - 2:
                r = max(r, sub)
        return r

    # Pick one axis to tile when a full inner slice would not fit the budget.
    tile_axis, tile = p, shape[p]
    if 2 * inner_elems * itemsize > _PAIR_BUDGET_BYTES:
        budget_elems = _PAIR_BUDGET_BYTES // (2 * itemsize)
        best_key = None
        for a in inner_axes:
            r = _align_req(a)
            if shape[a] <= r:
                continue  # tiling this axis cannot shrink the block
            rest = inner_elems // shape[a]
            t = (budget_elems // max(1, rest)) // r * r
            t = min(max(t, r), shape[a])
            pair = 2 * rest * t * itemsize
            # Prefer fitting the budget, then the cheapest alignment, then
            # the longest axis (more grid steps -> better pipelining).
            key = (max(pair, _PAIR_BUDGET_BYTES), r, -shape[a])
            if best_key is None or key < best_key:
                best_key, tile_axis, tile = key, a, t

    inner_block_elems = (inner_elems // shape[tile_axis]) * tile
    pair_bytes = 2 * inner_block_elems * itemsize

    # Batch several leading ("batch") indices per block when tiles are tiny,
    # to amortize the per-grid-step overhead -- but keep >= 2 steps along the
    # batched axis so a v7x megacore (2 TensorCores) has work for both cores.
    bB = 1
    if p >= 1:
        bB = max(1, min(shape[p - 1],
                        _TARGET_PAIR_BYTES // max(1, pair_bytes),
                        _PAIR_BUDGET_BYTES // max(1, pair_bytes)))
        if shape[p - 1] > 1 and pl.cdiv(shape[p - 1], bB) < 2:
            bB = pl.cdiv(shape[p - 1], 2)

    # Grid: [axes 0 .. p-2] (block 1), [axis p-1] (block bB), [tile axis].
    grid = tuple(shape[ax] for ax in range(max(0, p - 1)))
    if p >= 1:
        grid = grid + (pl.cdiv(shape[p - 1], bB),)
    grid = grid + (pl.cdiv(shape[tile_axis], tile),)
    tile_gidx = len(grid) - 1

    in_block = []
    for ax in range(n):
        if ax < p - 1:
            in_block.append(1)
        elif p >= 1 and ax == p - 1:
            in_block.append(bB)
        elif ax == tile_axis:
            in_block.append(tile)
        else:
            in_block.append(shape[ax])
    in_block = tuple(in_block)
    out_block = tuple(in_block[d] for d in dims)

    # Map each array axis to the grid index that drives its block index
    # (None -> block index 0, i.e. the block covers the full axis).
    in_src = [None] * n
    for ax in range(max(0, p - 1)):
        in_src[ax] = ax
    if p >= 1:
        in_src[p - 1] = p - 1
    in_src[tile_axis] = tile_gidx

    out_src = [None] * n
    for j in range(n):
        a = dims[j]
        if a < p:                  # identity prefix: j == a
            out_src[j] = in_src[a]
        elif a == tile_axis:
            out_src[j] = tile_gidx

    def in_index_map(*g):
        return tuple(g[s] if s is not None else 0 for s in in_src)

    def out_index_map(*g):
        return tuple(g[s] if s is not None else 0 for s in out_src)

    kernel = functools.partial(_transpose_kernel, perm=dims)
    return pl.pallas_call(
        kernel,
        out_shape=jax.ShapeDtypeStruct(out_shape, x.dtype),
        grid_spec=pltpu.PrefetchScalarGridSpec(
            num_scalar_prefetch=0,
            grid=grid,
            in_specs=[pl.BlockSpec(in_block, in_index_map)],
            out_specs=pl.BlockSpec(out_block, out_index_map),
        ),
        compiler_params=pltpu.CompilerParams(
            dimension_semantics=("parallel",) * len(grid),
            vmem_limit_bytes=_VMEM_LIMIT_BYTES,
        ),
        cost_estimate=_cost(x),
    )(x)


def permute_pallas(x: jax.Array, dims) -> jax.Array:
    """Pallas equivalent of torch.Tensor.permute(*dims)."""
    n = x.ndim
    dims = tuple(int(d) % n for d in dims)          # normalize negative axes
    assert sorted(dims) == list(range(n)), "dims must be a permutation of range(ndim)"

    if dims == tuple(range(n)):
        return x                                    # identity: nothing to move

    # Longest identity suffix of the permutation.
    k = 0
    while k < n and dims[n - 1 - k] == n - 1 - k:
        k += 1

    if k >= 2:
        # Lane + sublane axes untouched: relayout by DMA addressing alone.
        return _permute_copy_relayout(x, dims, k)
    return _permute_transpose(x, dims)


class Permute:
    """Mirror of the PyTorch nn.Module (no parameters)."""

    def __init__(self, dims):
        self.dims = list(dims)

    def __call__(self, x):
        return permute_pallas(x, self.dims)

    def extra_repr(self):
        return ", ".join(str(d) for d in self.dims)


if __name__ == "__main__":
    key = jax.random.PRNGKey(0)
    # NCHW input as typically fed to Permute([0, 2, 3, 1]) (channels-last).
    x = jax.random.normal(key, (2, 4, 16, 16), dtype=jnp.float32)

    mod = Permute([0, 2, 3, 1])
    y = jax.block_until_ready(mod(x))

    ref = jnp.transpose(x, (0, 2, 3, 1))
    assert y.shape == ref.shape, (y.shape, ref.shape)
    assert y.dtype == ref.dtype, (y.dtype, ref.dtype)
    assert bool(jnp.array_equal(y, ref)), "mismatch vs reference permute (NCHW->NHWC)"

    # Exercise the other dispatch paths against jnp.transpose as well.
    checks = [
        ((2, 16, 16, 4), (0, 3, 1, 2)),   # NHWC -> NCHW (tiled transpose path)
        ((2, 3, 8, 128), (1, 0, 2, 3)),   # leading-axis swap (pure DMA relayout path)
        ((16, 128), (1, 0)),              # plain 2-D transpose (no batch prefix)
    ]
    for i, (shape, dims) in enumerate(checks):
        xi = jax.random.normal(jax.random.PRNGKey(i + 1), shape, dtype=jnp.float32)
        yi = jax.block_until_ready(permute_pallas(xi, dims))
        refi = jnp.transpose(xi, dims)
        assert yi.shape == refi.shape and bool(jnp.array_equal(yi, refi)), \
            f"mismatch for shape={shape}, dims={dims}"

    print("KERNEL_OK")
</pallas_src>

<mosaic_0001>
module attributes {stable_mosaic.version = 11 : i64} {
  func.func @_transpose_kernel(%arg0: i32, %arg1: i32, %arg2: memref<1x4x16x16xf32, #tpu.memory_space<vmem>>, %arg3: memref<1x16x16x4xf32, #tpu.memory_space<vmem>>) attributes {dimension_semantics = [#tpu.dimension_semantics<parallel>, #tpu.dimension_semantics<parallel>], iteration_bounds = array<i64: 2, 1>, scalar_prefetch = 0 : i64, scratch_operands = 0 : i64, tpu.core_type = #tpu.core_type<tc>, window_params = [{transform_indices = @transform_0, window_bounds = array<i64: 1, 4, 16, 16>}, {transform_indices = @transform_1, window_bounds = array<i64: 1, 16, 16, 4>}]} {
    %c0 = arith.constant 0 : index
    %c0_0 = arith.constant 0 : index
    %c0_1 = arith.constant 0 : index
    %c0_2 = arith.constant 0 : index
    %0 = vector.load %arg2[%c0, %c0_0, %c0_1, %c0_2] : memref<1x4x16x16xf32, #tpu.memory_space<vmem>>, vector<1x4x16x16xf32>
    %1 = tpu.transpose %0, [0, 2, 3, 1] : vector<1x4x16x16xf32> -> vector<1x16x16x4xf32>
    %c0_3 = arith.constant 0 : index
    %c0_4 = arith.constant 0 : index
    %c0_5 = arith.constant 0 : index
    %c0_6 = arith.constant 0 : index
    %2 = vector.load %arg3[%c0_3, %c0_4, %c0_5, %c0_6] : memref<1x16x16x4xf32, #tpu.memory_space<vmem>>, vector<1x16x16x4xf32>
    tpu.vector_store %arg3[%c0_3, %c0_4, %c0_5, %c0_6], %1 {strides = array<i32>} : memref<1x16x16x4xf32, #tpu.memory_space<vmem>>, vector<1x16x16x4xf32>,
    return
  }
  func.func @transform_0(%arg0: i32, %arg1: i32) -> (i32, i32, i32, i32) {
    %c0_i32 = arith.constant 0 : i32
    %c0_i32_0 = arith.constant 0 : i32
    %c0_i32_1 = arith.constant 0 : i32
    return %arg0, %arg1, %c0_i32, %c0_i32_0 : i32, i32, i32, i32
  }
  func.func @transform_1(%arg0: i32, %arg1: i32) -> (i32, i32, i32, i32) {
    %c0_i32 = arith.constant 0 : i32
    %c0_i32_0 = arith.constant 0 : i32
    %c0_i32_1 = arith.constant 0 : i32
    return %arg0, %c0_i32, %c0_i32_0, %arg1 : i32, i32, i32, i32
  }
}

</mosaic_0001>

<llo_original>
// kernel: tpu_custom_call.1
$region0: #{tpu_custom_call.1}
  #allocation0 [shape = 'u32[]', space=smem, size = 0x4, offset = 0x4, fixed_abs, tag = 'smem constant byte address 0x4 - core index']
  #allocation1 [shape = 'u32[72,128]{1,0:T(1,128)}', space=vmem, size = 0x9000, scoped, tag = 'internal scratch']
  %s0 = inlined_call_operand.hbm [shape: f32[2,4,16,16], index: 0, kind: input, shape index: {}]
  %s1 = inlined_call_operand.vmem [shape: f32[2,16,16,4], index: 1, kind: output, shape index: {}]
  %s2 = sld [smem:[#allocation0]]
  $region41: #{tpu_custom_call.1} parent=0
    _
  %s4 = ssub.s32 1, %s2
  %s5 = scalar_select 0, %s4, %s2
  $region1: #{tpu_custom_call.1} parent=0
    #allocation2 [shape = 'u8[65536]{0}', space=vmem, size = 0x10000, scoped, tag = 'input window, operand 0']
    #allocation3 [shape = 's32[2]{0}', space=sflag, size = 0x8, scoped, tag = 'scoped memory for tpu_custom_call.1']
    %6 = vsyncpa [#allocation3], 0
    %s7 = scalar_lea.sflag [#allocation3], 1
    %8 = vsyncpa %s7, 0
    loop: start=0, step=1, limit=4
    $region2: #{tpu_custom_call.1} parent=1 // loop_pre_header
      _
    $region3: #{tpu_custom_call.1} parent=1 // loop_header
      %s10 = sphi 0, %s14
      %p11 = scmp.ge.s32.totalorder %s10, 4
      %s17 = sphi 0, %s29
      %s18 = sphi 0, %s25
      %s19 = sphi 0, %s17
      %s20 = sphi 0, %s18
      %s21 = sphi 0, %s19
      %s22 = sphi 0, %s20
      %s34 = sphi 0, %s36
      %s37 = sphi 0, %s34
      %s38 = sphi 0, %s37
      %s54 = sphi 0, %s38
      %s62 = sphi 0, %s64
      %s65 = sphi 0, %s62
      %s66 = sphi 0, %s65
      %s82 = sphi 0, %s66
    $region4: #{tpu_custom_call.1} parent=1 // loop_header_branch
      %13 = sbr.rel (%p11) target = $region8
    $region5: #{tpu_custom_call.1} parent=1 // loop_body
      %s15 = ssub.s32 %s10, 1
      %s16 = ssub.s32 %s10, 2
      %s23 = sadd.s32 1, %s18
      %p24 = scmp.ge.s32.totalorder %s23, 1
      %s25 = scalar_select %p24, 0, %s23
      %s26 = sadd.s32 1, %s17
      %s27 = scalar_select %p24, %s26, %s17
      %p28 = scmp.ge.s32.totalorder %s27, 2
      %s29 = scalar_select %p28, 0, %s27
      %s30 = ssub.s32 %s17, %s29
      %s31 = ssub.s32 %s18, %s25
      %s32 = sor.u32 %s30, %s31
      %p33 = scmp.eq.s32.totalorder %s32, 0
      %s35 = sadd.s32 %s34, 1
      %s36 = scalar_select %p33, %s34, %s35
      %p39 = pneg %p33
      %p40 = scmp.eq.s32.totalorder %s10, 1
      %p41 = por %p39, %p40
      %p42 = scmp.ne.s32.totalorder %s34, %s37
      %p43 = scmp.eq.s32.totalorder %s10, 0
      %p44 = por %p42, %p43
      %p45 = scmp.ne.s32.totalorder %s34, %s37
      %p46 = scmp.eq.s32.totalorder %s15, 1
      %p47 = por %p45, %p46
      %p48 = scmp.ne.s32.totalorder %s37, %s38
      %p49 = scmp.eq.s32.totalorder %s15, 0
      %p50 = por %p48, %p49
      %p51 = scmp.ne.s32.totalorder %s37, %s38
      %p52 = scmp.eq.s32.totalorder %s16, 1
      %p53 = por %p51, %p52
      %p55 = scmp.ne.s32.totalorder %s38, %s54
      %p56 = scmp.eq.s32.totalorder %s16, 0
      %p57 = por %p55, %p56
      %s58 = ssub.s32 %s17, %s29
      %s59 = ssub.s32 %s18, %s25
      %s60 = sor.u32 %s58, %s59
      %p61 = scmp.eq.s32.totalorder %s60, 0
      %s63 = sadd.s32 %s62, 1
      %s64 = scalar_select %p61, %s62, %s63
      %p67 = pneg %p61
      %p68 = scmp.eq.s32.totalorder %s10, 1
      %p69 = por %p67, %p68
      %p70 = scmp.ne.s32.totalorder %s62, %s65
      %p71 = scmp.eq.s32.totalorder %s10, 0
      %p72 = por %p70, %p71
      %p73 = scmp.ne.s32.totalorder %s62, %s65
      %p74 = scmp.eq.s32.totalorder %s15, 1
      %p75 = por %p73, %p74
      %p76 = scmp.ne.s32.totalorder %s65, %s66
      %p77 = scmp.eq.s32.totalorder %s15, 0
      %p78 = por %p76, %p77
      %p79 = scmp.ne.s32.totalorder %s65, %s66
      %p80 = scmp.eq.s32.totalorder %s16, 1
      %p81 = por %p79, %p80
      %p83 = scmp.ne.s32.totalorder %s66, %s82
      %p84 = scmp.eq.s32.totalorder %s16, 0
      %p85 = por %p83, %p84
      %p86 = scmp.le.s32.totalorder 1, %s10
      %p87 = scmp.lt.s32.totalorder %s10, 3
      %p88 = pnand %p86, %p87
      %p89 = pneg %p88
      // Predicated region
      $region9: #{tpu_custom_call.1} parent=5 // pred_check
        _
      $region10: #{tpu_custom_call.1} parent=5 // pred_check_branch
        %91 = sbr.rel (%p88) target = $region12
      $region11: #{tpu_custom_call.1} parent=5 // pred_region
        %s92 = ssub.s32 %s10, 1
      $region12: #{tpu_custom_call.1} parent=5 // pred_fallthru
        _
      %p93 = scmp.lt.s32.totalorder %s10, 2
      // Predicated region
      $region13: #{tpu_custom_call.1} parent=5 // pred_check
        %p94 = pneg %p93
      $region14: #{tpu_custom_call.1} parent=5 // pred_check_branch
        %96 = sbr.rel (%p94) target = $region16
      $region15: #{tpu_custom_call.1} parent=5 // pred_region
        // Predicated region
        $region17: #{tpu_custom_call.1} parent=15 // pred_check
          %p97 = pneg %p44
        $region18: #{tpu_custom_call.1} parent=15 // pred_check_branch
          %99 = sbr.rel (%p97) target = $region20
        $region19: #{tpu_custom_call.1} parent=15 // pred_region
          %s100 = sand.u32 %s34, 1
          %s101 = scalar_lea.sflag [#allocation3], %s100
          %s102 = sand.u32 %s34, 1
          %s103 = smul.addr %s102, 64
          %s104 = scalar_lea.vmem [#allocation2], %s103
          %s105 = smul.u32 4, %s18
          %107 = vsyncadd %s101, 0
          %s108 = smul.addr %s105, 2
          %s109 = smul.addr %s17, 8
          %s110 = sadd.s32 %s108, %s109
          %s111 = smul.addr %s110, 8
          %s112 = scalar_lea.hbm %s0, %s111
          %s113 = sshll.u32 %s112, 4
          %s114 = int_to_ptr.hbm [resolvable:$true] %s113
          %s115 = sshll.u32 %s104, 4
          %s116 = int_to_ptr.vmem [resolvable:$true] %s115
          %121 = dma.hbm_to_vmem [thread:$0]  %s114, 1024, %s116, %s101, 128, 128, 8
        $region20: #{tpu_custom_call.1} parent=15 // pred_fallthru
          _
      $region16: #{tpu_custom_call.1} parent=5 // pred_fallthru
        _
      %p122 = scmp.le.s32.totalorder 1, %s10
      %p123 = scmp.lt.s32.totalorder %s10, 3
      %p124 = pnand %p122, %p123
      %p125 = pneg %p124
      // Predicated region
      $region21: #{tpu_custom_call.1} parent=5 // pred_check
        _
      $region22: #{tpu_custom_call.1} parent=5 // pred_check_branch
        %127 = sbr.rel (%p124) target = $region24
      $region23: #{tpu_custom_call.1} parent=5 // pred_region
        %s128 = ssub.s32 %s10, 1
        %s129 = sand.u32 %s37, 1
        %s130 = scalar_lea.sflag [#allocation3], %s129
        %s131 = sand.u32 %s37, 1
        %s132 = smul.addr %s131, 64
        %s133 = scalar_lea.vmem [#allocation2], %s132
        // Predicated region
        $region25: #{tpu_custom_call.1} parent=23 // pred_check
          %p134 = pneg %p50
        $region26: #{tpu_custom_call.1} parent=23 // pred_check_branch
          %136 = sbr.rel (%p134) target = $region28
        $region27: #{tpu_custom_call.1} parent=23 // pred_region
          %138 = dma.done %s130, 1024
        $region28: #{tpu_custom_call.1} parent=23 // pred_fallthru
          _
        %s139 = sand.u32 %s37, 1
        %s140 = scalar_lea.sflag [#allocation3], %s139
        %s141 = sand.u32 %s37, 1
        %s142 = smul.addr %s141, 64
        %s143 = scalar_lea.vmem [#allocation2], %s142
        %p144 = pneg %p50
        %p145 = pneg %p47
        %p146 = pneg %p78
        %p147 = pneg %p75
        %p148 = scmp.lt.s32.totalorder %s19, 1
        %s149 = scalar_select %p148, %s19, 1
        %p150 = scmp.lt.s32.totalorder %s20, 0
        %s151 = scalar_select %p150, %s20, 0
        %s152 = smul.addr %s149, 32
        %s153 = sadd.s32 %s151, %s152
        %s154 = smul.addr %s153, 8
        %s155 = scalar_lea.vmem %s1, %s154
        %s156 = smul.u32 4, %s20
        %p157 = scmp.lt.s32.totalorder %s19, 1
        %s158 = scalar_select %p157, %s19, 1
        %p159 = scmp.lt.s32.totalorder %s20, 0
        %s160 = scalar_select %p159, %s20, 0
        %s161 = smul.addr %s158, 32
        %s162 = sadd.s32 %s160, %s161
        %s163 = smul.addr %s162, 8
        %s164 = scalar_lea.vmem %s1, %s163
        %v165 = vld [vmem:[%s133] sm:$0xff]
        %v166 = vld [vmem:[%s133 + $0x8] sm:$0xff]
        %v167 = vld [vmem:[%s133 + $0x10] sm:$0xff]
        %v168 = vld [vmem:[%s133 + $0x18] sm:$0xff]
        %v169 = vld [vmem:[%s133 + $0x20] sm:$0xff]
        %v170 = vld [vmem:[%s133 + $0x28] sm:$0xff]
        %v171 = vld [vmem:[%s133 + $0x30] sm:$0xff]
        %v172 = vld [vmem:[%s133 + $0x38] sm:$0xff]
        %173 = vxpose.xlu0.b32.start [1/16] %v165, 128
        %174 = vxpose.xlu0.b32.cont [2/16] %v166, 128
        %175 = vxpose.xlu0.b32.cont [3/16] 0.0, 128
        %176 = vxpose.xlu0.b32.cont [4/16] 0.0, 128
        %177 = vxpose.xlu0.b32.cont [5/16] 0.0, 128
        %178 = vxpose.xlu0.b32.cont [6/16] 0.0, 128
        %179 = vxpose.xlu0.b32.cont [7/16] 0.0, 128
        %180 = vxpose.xlu0.b32.cont [8/16] 0.0, 128
        %181 = vxpose.xlu0.b32.cont [9/16] 0.0, 128
        %182 = vxpose.xlu0.b32.cont [10/16] 0.0, 128
        %183 = vxpose.xlu0.b32.cont [11/16] 0.0, 128
        %184 = vxpose.xlu0.b32.cont [12/16] 0.0, 128
        %185 = vxpose.xlu0.b32.cont [13/16] 0.0, 128
        %186 = vxpose.xlu0.b32.cont [14/16] 0.0, 128
        %187 = vxpose.xlu0.b32.cont [15/16] 0.0, 128
        %188 = vxpose.xlu0.b32.end [16/16] 0.0, 128
        %v189 = vpop.trf.xlu0
        %v190 = vpop.trf.xlu0
        %v191 = vpop.trf.xlu0
        %v192 = vpop.trf.xlu0
        %v193 = vpop.trf.xlu0
        %v194 = vpop.trf.xlu0
        %v195 = vpop.trf.xlu0
        %v196 = vpop.trf.xlu0
        %v197 = vpop.trf.xlu0
        %v198 = vpop.trf.xlu0
        %v199 = vpop.trf.xlu0
        %v200 = vpop.trf.xlu0
        %v201 = vpop.trf.xlu0
        %v202 = vpop.trf.xlu0
        %v203 = vpop.trf.xlu0
        %v204 = vpop.trf.xlu0
        %205 = vxpose.xlu0.b32.start [1/16] %v167, 128
        %206 = vxpose.xlu0.b32.cont [2/16] %v168, 128
        %207 = vxpose.xlu0.b32.cont [3/16] 0.0, 128
        %208 = vxpose.xlu0.b32.cont [4/16] 0.0, 128
        %209 = vxpose.xlu0.b32.cont [5/16] 0.0, 128
        %210 = vxpose.xlu0.b32.cont [6/16] 0.0, 128
        %211 = vxpose.xlu0.b32.cont [7/16] 0.0, 128
        %212 = vxpose.xlu0.b32.cont [8/16] 0.0, 128
        %213 = vxpose.xlu0.b32.cont [9/16] 0.0, 128
        %214 = vxpose.xlu0.b32.cont [10/16] 0.0, 128
        %215 = vxpose.xlu0.b32.cont [11/16] 0.0, 128
        %216 = vxpose.xlu0.b32.cont [12/16] 0.0, 128
        %217 = vxpose.xlu0.b32.cont [13/16] 0.0, 128
        %218 = vxpose.xlu0.b32.cont [14/16] 0.0, 128
        %219 = vxpose.xlu0.b32.cont [15/16] 0.0, 128
        %220 = vxpose.xlu0.b32.end [16/16] 0.0, 128
        %v221 = vpop.trf.xlu0
        %v222 = vpop.trf.xlu0
        %v223 = vpop.trf.xlu0
        %v224 = vpop.trf.xlu0
        %v225 = vpop.trf.xlu0
        %v226 = vpop.trf.xlu0
        %v227 = vpop.trf.xlu0
        %v228 = vpop.trf.xlu0
        %v229 = vpop.trf.xlu0
        %v230 = vpop.trf.xlu0
        %v231 = vpop.trf.xlu0
        %v232 = vpop.trf.xlu0
        %v233 = vpop.trf.xlu0
        %v234 = vpop.trf.xlu0
        %v235 = vpop.trf.xlu0
        %v236 = vpop.trf.xlu0
        %237 = vxpose.xlu0.b32.start [1/16] %v169, 128
        %238 = vxpose.xlu0.b32.cont [2/16] %v170, 128
        %239 = vxpose.xlu0.b32.cont [3/16] 0.0, 128
        %240 = vxpose.xlu0.b32.cont [4/16] 0.0, 128
        %241 = vxpose.xlu0.b32.cont [5/16] 0.0, 128
        %242 = vxpose.xlu0.b32.cont [6/16] 0.0, 128
        %243 = vxpose.xlu0.b32.cont [7/16] 0.0, 128
        %244 = vxpose.xlu0.b32.cont [8/16] 0.0, 128
        %245 = vxpose.xlu0.b32.cont [9/16] 0.0, 128
        %246 = vxpose.xlu0.b32.cont [10/16] 0.0, 128
        %247 = vxpose.xlu0.b32.cont [11/16] 0.0, 128
        %248 = vxpose.xlu0.b32.cont [12/16] 0.0, 128
        %249 = vxpose.xlu0.b32.cont [13/16] 0.0, 128
        %250 = vxpose.xlu0.b32.cont [14/16] 0.0, 128
        %251 = vxpose.xlu0.b32.cont [15/16] 0.0, 128
        %252 = vxpose.xlu0.b32.end [16/16] 0.0, 128
        %v253 = vpop.trf.xlu0
        %v254 = vpop.trf.xlu0
        %v255 = vpop.trf.xlu0
        %v256 = vpop.trf.xlu0
        %v257 = vpop.trf.xlu0
        %v258 = vpop.trf.xlu0
        %v259 = vpop.trf.xlu0
        %v260 = vpop.trf.xlu0
        %v261 = vpop.trf.xlu0
        %v262 = vpop.trf.xlu0
        %v263 = vpop.trf.xlu0
        %v264 = vpop.trf.xlu0
        %v265 = vpop.trf.xlu0
        %v266 = vpop.trf.xlu0
        %v267 = vpop.trf.xlu0
        %v268 = vpop.trf.xlu0
        %269 = vxpose.xlu0.b32.start [1/16] %v171, 128
        %270 = vxpose.xlu0.b32.cont [2/16] %v172, 128
        %271 = vxpose.xlu0.b32.cont [3/16] 0.0, 128
        %272 = vxpose.xlu0.b32.cont [4/16] 0.0, 128
        %273 = vxpose.xlu0.b32.cont [5/16] 0.0, 128
        %274 = vxpose.xlu0.b32.cont [6/16] 0.0, 128
        %275 = vxpose.xlu0.b32.cont [7/16] 0.0, 128
        %276 = vxpose.xlu0.b32.cont [8/16] 0.0, 128
        %277 = vxpose.xlu0.b32.cont [9/16] 0.0, 128
        %278 = vxpose.xlu0.b32.cont [10/16] 0.0, 128
        %279 = vxpose.xlu0.b32.cont [11/16] 0.0, 128
        %280 = vxpose.xlu0.b32.cont [12/16] 0.0, 128
        %281 = vxpose.xlu0.b32.cont [13/16] 0.0, 128
        %282 = vxpose.xlu0.b32.cont [14/16] 0.0, 128
        %283 = vxpose.xlu0.b32.cont [15/16] 0.0, 128
        %284 = vxpose.xlu0.b32.end [16/16] 0.0, 128
        %v285 = vpop.trf.xlu0
        %v286 = vpop.trf.xlu0
        %v287 = vpop.trf.xlu0
        %v288 = vpop.trf.xlu0
        %v289 = vpop.trf.xlu0
        %v290 = vpop.trf.xlu0
        %v291 = vpop.trf.xlu0
        %v292 = vpop.trf.xlu0
        %v293 = vpop.trf.xlu0
        %v294 = vpop.trf.xlu0
        %v295 = vpop.trf.xlu0
        %v296 = vpop.trf.xlu0
        %v297 = vpop.trf.xlu0
        %v298 = vpop.trf.xlu0
        %v299 = vpop.trf.xlu0
        %v300 = vpop.trf.xlu0
        %v301 = vrot.slane %v253, 4
        %vm302 = vcmask 1047556
        %v303 = vsel %vm302, %v301, %v189
        %v304 = vrot.slane %v189, 4
        %v305 = vsel %vm302, %v253, %v304
        %v307 = vunpack.c.l.s4 1983009808
        %v308 = vunpack.c.0.s8 %v307
        %v309 = vperm.slane %v303, %v308
        %v311 = vunpack.c.l.s4 1983009808
        %v312 = vunpack.c.0.s8 %v311
        %v313 = vperm.slane %v305, %v312
        %v314 = vrot.slane %v285, 4
        %v315 = vsel %vm302, %v314, %v221
        %v316 = vrot.slane %v221, 4
        %v317 = vsel %vm302, %v285, %v316
        %v319 = vunpack.c.l.s4 1983009808
        %v320 = vunpack.c.0.s8 %v319
        %v321 = vperm.slane %v315, %v320
        %v323 = vunpack.c.l.s4 1983009808
        %v324 = vunpack.c.0.s8 %v323
        %v325 = vperm.slane %v317, %v324
        %v326 = vrot.slane %v321, 4
        %v327 = vsel %vm302, %v326, %v309
        %v328 = vrot.slane %v309, 4
        %v329 = vsel %vm302, %v321, %v328
        %v331 = vunpack.c.l.s4 1934713408
        %v332 = vunpack.c.0.s8 %v331
        %v333 = vperm.slane %v327, %v332
        %v335 = vunpack.c.l.s4 1934713408
        %v336 = vunpack.c.0.s8 %v335
        %v337 = vperm.slane %v329, %v336
        %v338 = vrot.slane %v325, 4
        %v339 = vsel %vm302, %v338, %v313
        %v340 = vrot.slane %v313, 4
        %v341 = vsel %vm302, %v325, %v340
        %v343 = vunpack.c.l.s4 1934713408
        %v344 = vunpack.c.0.s8 %v343
        %v345 = vperm.slane %v339, %v344
        %v347 = vunpack.c.l.s4 1934713408
        %v348 = vunpack.c.0.s8 %v347
        %v349 = vperm.slane %v341, %v348
        %v350 = vrot.slane %v333, 4
        %v351 = vsel %vm302, 0.0, %v350
        %v352 = vrot.slane %v337, 4
        %v353 = vsel %vm302, 0.0, %v352
        %v354 = vrot.slane %v345, 4
        %v355 = vsel %vm302, 0.0, %v354
        %v356 = vrot.slane %v349, 4
        %v357 = vsel %vm302, 0.0, %v356
        %v358 = vrot.slane %v254, 4
        %v359 = vsel %vm302, %v358, %v190
        %v360 = vrot.slane %v190, 4
        %v361 = vsel %vm302, %v254, %v360
        %v363 = vunpack.c.l.s4 1983009808
        %v364 = vunpack.c.0.s8 %v363
        %v365 = vperm.slane %v359, %v364
        %v367 = vunpack.c.l.s4 1983009808
        %v368 = vunpack.c.0.s8 %v367
        %v369 = vperm.slane %v361, %v368
        %v370 = vrot.slane %v286, 4
        %v371 = vsel %vm302, %v370, %v222
        %v372 = vrot.slane %v222, 4
        %v373 = vsel %vm302, %v286, %v372
        %v375 = vunpack.c.l.s4 1983009808
        %v376 = vunpack.c.0.s8 %v375
        %v377 = vperm.slane %v371, %v376
        %v379 = vunpack.c.l.s4 1983009808
        %v380 = vunpack.c.0.s8 %v379
        %v381 = vperm.slane %v373, %v380
        %v382 = vrot.slane %v377, 4
        %v383 = vsel %vm302, %v382, %v365
        %v384 = vrot.slane %v365, 4
        %v385 = vsel %vm302, %v377, %v384
        %v387 = vunpack.c.l.s4 1934713408
        %v388 = vunpack.c.0.s8 %v387
        %v389 = vperm.slane %v383, %v388
        %v391 = vunpack.c.l.s4 1934713408
        %v392 = vunpack.c.0.s8 %v391
        %v393 = vperm.slane %v385, %v392
        %v394 = vrot.slane %v381, 4
        %v395 = vsel %vm302, %v394, %v369
        %v396 = vrot.slane %v369, 4
        %v397 = vsel %vm302, %v381, %v396
        %v399 = vunpack.c.l.s4 1934713408
        %v400 = vunpack.c.0.s8 %v399
        %v401 = vperm.slane %v395, %v400
        %v403 = vunpack.c.l.s4 1934713408
        %v404 = vunpack.c.0.s8 %v403
        %v405 = vperm.slane %v397, %v404
        %v406 = vrot.slane %v389, 4
        %v407 = vsel %vm302, 0.0, %v406
        %v408 = vrot.slane %v393, 4
        %v409 = vsel %vm302, 0.0, %v408
        %v410 = vrot.slane %v401, 4
        %v411 = vsel %vm302, 0.0, %v410
        %v412 = vrot.slane %v405, 4
        %v413 = vsel %vm302, 0.0, %v412
        %414 = vxpose.xlu0.b32.start [1/16] %v333, 128
        %415 = vxpose.xlu0.b32.cont [2/16] 0.0, 128
        %416 = vxpose.xlu0.b32.cont [3/16] 0.0, 128
        %417 = vxpose.xlu0.b32.cont [4/16] 0.0, 128
        %418 = vxpose.xlu0.b32.cont [5/16] 0.0, 128
        %419 = vxpose.xlu0.b32.cont [6/16] 0.0, 128
        %420 = vxpose.xlu0.b32.cont [7/16] 0.0, 128
        %421 = vxpose.xlu0.b32.cont [8/16] 0.0, 128
        %422 = vxpose.xlu0.b32.cont [9/16] 0.0, 128
        %423 = vxpose.xlu0.b32.cont [10/16] 0.0, 128
        %424 = vxpose.xlu0.b32.cont [11/16] 0.0, 128
        %425 = vxpose.xlu0.b32.cont [12/16] 0.0, 128
        %426 = vxpose.xlu0.b32.cont [13/16] 0.0, 128
        %427 = vxpose.xlu0.b32.cont [14/16] 0.0, 128
        %428 = vxpose.xlu0.b32.cont [15/16] 0.0, 128
        %429 = vxpose.xlu0.b32.end [16/16] 0.0, 128
        %v430 = vpop.trf.xlu0
        %v431 = vpop.trf.xlu0
        %v432 = vpop.trf.xlu0
        %v433 = vpop.trf.xlu0
        %v434 = vpop.trf.xlu0
        %v435 = vpop.trf.xlu0
        %v436 = vpop.trf.xlu0
        %v437 = vpop.trf.xlu0
        %v438 = vpop.trf.xlu0
        %v439 = vpop.trf.xlu0
        %v440 = vpop.trf.xlu0
        %v441 = vpop.trf.xlu0
        %v442 = vpop.trf.xlu0
        %v443 = vpop.trf.xlu0
        %v444 = vpop.trf.xlu0
        %v445 = vpop.trf.xlu0
        %446 = vxpose.xlu0.b32.start [1/16] %v351, 128
        %447 = vxpose.xlu0.b32.cont [2/16] 0.0, 128
        %448 = vxpose.xlu0.b32.cont [3/16] 0.0, 128
        %449 = vxpose.xlu0.b32.cont [4/16] 0.0, 128
        %450 = vxpose.xlu0.b32.cont [5/16] 0.0, 128
        %451 = vxpose.xlu0.b32.cont [6/16] 0.0, 128
        %452 = vxpose.xlu0.b32.cont [7/16] 0.0, 128
        %453 = vxpose.xlu0.b32.cont [8/16] 0.0, 128
        %454 = vxpose.xlu0.b32.cont [9/16] 0.0, 128
        %455 = vxpose.xlu0.b32.cont [10/16] 0.0, 128
        %456 = vxpose.xlu0.b32.cont [11/16] 0.0, 128
        %457 = vxpose.xlu0.b32.cont [12/16] 0.0, 128
        %458 = vxpose.xlu0.b32.cont [13/16] 0.0, 128
        %459 = vxpose.xlu0.b32.cont [14/16] 0.0, 128
        %460 = vxpose.xlu0.b32.cont [15/16] 0.0, 128
        %461 = vxpose.xlu0.b32.end [16/16] 0.0, 128
        %v462 = vpop.trf.xlu0
        %v463 = vpop.trf.xlu0
        %v464 = vpop.trf.xlu0
        %v465 = vpop.trf.xlu0
        %v466 = vpop.trf.xlu0
        %v467 = vpop.trf.xlu0
        %v468 = vpop.trf.xlu0
        %v469 = vpop.trf.xlu0
        %v470 = vpop.trf.xlu0
        %v471 = vpop.trf.xlu0
        %v472 = vpop.trf.xlu0
        %v473 = vpop.trf.xlu0
        %v474 = vpop.trf.xlu0
        %v475 = vpop.trf.xlu0
        %v476 = vpop.trf.xlu0
        %v477 = vpop.trf.xlu0
        %478 = vxpose.xlu0.b32.start [1/16] %v337, 128
        %479 = vxpose.xlu0.b32.cont [2/16] 0.0, 128
        %480 = vxpose.xlu0.b32.cont [3/16] 0.0, 128
        %481 = vxpose.xlu0.b32.cont [4/16] 0.0, 128
        %482 = vxpose.xlu0.b32.cont [5/16] 0.0, 128
        %483 = vxpose.xlu0.b32.cont [6/16] 0.0, 128
        %484 = vxpose.xlu0.b32.cont [7/16] 0.0, 128
        %485 = vxpose.xlu0.b32.cont [8/16] 0.0, 128
        %486 = vxpose.xlu0.b32.cont [9/16] 0.0, 128
        %487 = vxpose.xlu0.b32.cont [10/16] 0.0, 128
        %488 = vxpose.xlu0.b32.cont [11/16] 0.0, 128
        %489 = vxpose.xlu0.b32.cont [12/16] 0.0, 128
        %490 = vxpose.xlu0.b32.cont [13/16] 0.0, 128
        %491 = vxpose.xlu0.b32.cont [14/16] 0.0, 128
        %492 = vxpose.xlu0.b32.cont [15/16] 0.0, 128
        %493 = vxpose.xlu0.b32.end [16/16] 0.0, 128
        %v494 = vpop.trf.xlu0
        %v495 = vpop.trf.xlu0
        %v496 = vpop.trf.xlu0
        %v497 = vpop.trf.xlu0
        %v498 = vpop.trf.xlu0
        %v499 = vpop.trf.xlu0
        %v500 = vpop.trf.xlu0
        %v501 = vpop.trf.xlu0
        %v502 = vpop.trf.xlu0
        %v503 = vpop.trf.xlu0
        %v504 = vpop.trf.xlu0
        %v505 = vpop.trf.xlu0
        %v506 = vpop.trf.xlu0
        %v507 = vpop.trf.xlu0
        %v508 = vpop.trf.xlu0
        %v509 = vpop.trf.xlu0
        %510 = vxpose.xlu0.b32.start [1/16] %v353, 128
        %511 = vxpose.xlu0.b32.cont [2/16] 0.0, 128
        %512 = vxpose.xlu0.b32.cont [3/16] 0.0, 128
        %513 = vxpose.xlu0.b32.cont [4/16] 0.0, 128
        %514 = vxpose.xlu0.b32.cont [5/16] 0.0, 128
        %515 = vxpose.xlu0.b32.cont [6/16] 0.0, 128
        %516 = vxpose.xlu0.b32.cont [7/16] 0.0, 128
        %517 = vxpose.xlu0.b32.cont [8/16] 0.0, 128
        %518 = vxpose.xlu0.b32.cont [9/16] 0.0, 128
        %519 = vxpose.xlu0.b32.cont [10/16] 0.0, 128
        %520 = vxpose.xlu0.b32.cont [11/16] 0.0, 128
        %521 = vxpose.xlu0.b32.cont [12/16] 0.0, 128
        %522 = vxpose.xlu0.b32.cont [13/16] 0.0, 128
        %523 = vxpose.xlu0.b32.cont [14/16] 0.0, 128
        %524 = vxpose.xlu0.b32.cont [15/16] 0.0, 128
        %525 = vxpose.xlu0.b32.end [16/16] 0.0, 128
        %v526 = vpop.trf.xlu0
        %v527 = vpop.trf.xlu0
        %v528 = vpop.trf.xlu0
        %v529 = vpop.trf.xlu0
        %v530 = vpop.trf.xlu0
        %v531 = vpop.trf.xlu0
        %v532 = vpop.trf.xlu0
        %v533 = vpop.trf.xlu0
        %v534 = vpop.trf.xlu0
        %v535 = vpop.trf.xlu0
        %v536 = vpop.trf.xlu0
        %v537 = vpop.trf.xlu0
        %v538 = vpop.trf.xlu0
        %v539 = vpop.trf.xlu0
        %v540 = vpop.trf.xlu0
        %v541 = vpop.trf.xlu0
        %542 = vxpose.xlu0.b32.start [1/16] %v345, 128
        %543 = vxpose.xlu0.b32.cont [2/16] 0.0, 128
        %544 = vxpose.xlu0.b32.cont [3/16] 0.0, 128
        %545 = vxpose.xlu0.b32.cont [4/16] 0.0, 128
        %546 = vxpose.xlu0.b32.cont [5/16] 0.0, 128
        %547 = vxpose.xlu0.b32.cont [6/16] 0.0, 128
        %548 = vxpose.xlu0.b32.cont [7/16] 0.0, 128
        %549 = vxpose.xlu0.b32.cont [8/16] 0.0, 128
        %550 = vxpose.xlu0.b32.cont [9/16] 0.0, 128
        %551 = vxpose.xlu0.b32.cont [10/16] 0.0, 128
        %552 = vxpose.xlu0.b32.cont [11/16] 0.0, 128
        %553 = vxpose.xlu0.b32.cont [12/16] 0.0, 128
        %554 = vxpose.xlu0.b32.cont [13/16] 0.0, 128
        %555 = vxpose.xlu0.b32.cont [14/16] 0.0, 128
        %556 = vxpose.xlu0.b32.cont [15/16] 0.0, 128
        %557 = vxpose.xlu0.b32.end [16/16] 0.0, 128
        %v558 = vpop.trf.xlu0
        %v559 = vpop.trf.xlu0
        %v560 = vpop.trf.xlu0
        %v561 = vpop.trf.xlu0
        %v562 = vpop.trf.xlu0
        %v563 = vpop.trf.xlu0
        %v564 = vpop.trf.xlu0
        %v565 = vpop.trf.xlu0
        %v566 = vpop.trf.xlu0
        %v567 = vpop.trf.xlu0
        %v568 = vpop.trf.xlu0
        %v569 = vpop.trf.xlu0
        %v570 = vpop.trf.xlu0
        %v571 = vpop.trf.xlu0
        %v572 = vpop.trf.xlu0
        %v573 = vpop.trf.xlu0
        %574 = vxpose.xlu0.b32.start [1/16] %v355, 128
        %575 = vxpose.xlu0.b32.cont [2/16] 0.0, 128
        %576 = vxpose.xlu0.b32.cont [3/16] 0.0, 128
        %577 = vxpose.xlu0.b32.cont [4/16] 0.0, 128
        %578 = vxpose.xlu0.b32.cont [5/16] 0.0, 128
        %579 = vxpose.xlu0.b32.cont [6/16] 0.0, 128
        %580 = vxpose.xlu0.b32.cont [7/16] 0.0, 128
        %581 = vxpose.xlu0.b32.cont [8/16] 0.0, 128
        %582 = vxpose.xlu0.b32.cont [9/16] 0.0, 128
        %583 = vxpose.xlu0.b32.cont [10/16] 0.0, 128
        %584 = vxpose.xlu0.b32.cont [11/16] 0.0, 128
        %585 = vxpose.xlu0.b32.cont [12/16] 0.0, 128
        %586 = vxpose.xlu0.b32.cont [13/16] 0.0, 128
        %587 = vxpose.xlu0.b32.cont [14/16] 0.0, 128
        %588 = vxpose.xlu0.b32.cont [15/16] 0.0, 128
        %589 = vxpose.xlu0.b32.end [16/16] 0.0, 128
        %v590 = vpop.trf.xlu0
        %v591 = vpop.trf.xlu0
        %v592 = vpop.trf.xlu0
        %v593 = vpop.trf.xlu0
        %v594 = vpop.trf.xlu0
        %v595 = vpop.trf.xlu0
        %v596 = vpop.trf.xlu0
        %v597 = vpop.trf.xlu0
        %v598 = vpop.trf.xlu0
        %v599 = vpop.trf.xlu0
        %v600 = vpop.trf.xlu0
        %v601 = vpop.trf.xlu0
        %v602 = vpop.trf.xlu0
        %v603 = vpop.trf.xlu0
        %v604 = vpop.trf.xlu0
        %v605 = vpop.trf.xlu0
        %606 = vxpose.xlu0.b32.start [1/16] %v349, 128
        %607 = vxpose.xlu0.b32.cont [2/16] 0.0, 128
        %608 = vxpose.xlu0.b32.cont [3/16] 0.0, 128
        %609 = vxpose.xlu0.b32.cont [4/16] 0.0, 128
        %610 = vxpose.xlu0.b32.cont [5/16] 0.0, 128
        %611 = vxpose.xlu0.b32.cont [6/16] 0.0, 128
        %612 = vxpose.xlu0.b32.cont [7/16] 0.0, 128
        %613 = vxpose.xlu0.b32.cont [8/16] 0.0, 128
        %614 = vxpose.xlu0.b32.cont [9/16] 0.0, 128
        %615 = vxpose.xlu0.b32.cont [10/16] 0.0, 128
        %616 = vxpose.xlu0.b32.cont [11/16] 0.0, 128
        %617 = vxpose.xlu0.b32.cont [12/16] 0.0, 128
        %618 = vxpose.xlu0.b32.cont [13/16] 0.0, 128
        %619 = vxpose.xlu0.b32.cont [14/16] 0.0, 128
        %620 = vxpose.xlu0.b32.cont [15/16] 0.0, 128
        %621 = vxpose.xlu0.b32.end [16/16] 0.0, 128
        %v622 = vpop.trf.xlu0
        %v623 = vpop.trf.xlu0
        %v624 = vpop.trf.xlu0
        %v625 = vpop.trf.xlu0
        %v626 = vpop.trf.xlu0
        %v627 = vpop.trf.xlu0
        %v628 = vpop.trf.xlu0
        %v629 = vpop.trf.xlu0
        %v630 = vpop.trf.xlu0
        %v631 = vpop.trf.xlu0
        %v632 = vpop.trf.xlu0
        %v633 = vpop.trf.xlu0
        %v634 = vpop.trf.xlu0
        %v635 = vpop.trf.xlu0
        %v636 = vpop.trf.xlu0
        %v637 = vpop.trf.xlu0
        %638 = vxpose.xlu0.b32.start [1/16] %v357, 128
        %639 = vxpose.xlu0.b32.cont [2/16] 0.0, 128
        %640 = vxpose.xlu0.b32.cont [3/16] 0.0, 128
        %641 = vxpose.xlu0.b32.cont [4/16] 0.0, 128
        %642 = vxpose.xlu0.b32.cont [5/16] 0.0, 128
        %643 = vxpose.xlu0.b32.cont [6/16] 0.0, 128
        %644 = vxpose.xlu0.b32.cont [7/16] 0.0, 128
        %645 = vxpose.xlu0.b32.cont [8/16] 0.0, 128
        %646 = vxpose.xlu0.b32.cont [9/16] 0.0, 128
        %647 = vxpose.xlu0.b32.cont [10/16] 0.0, 128
        %648 = vxpose.xlu0.b32.cont [11/16] 0.0, 128
        %649 = vxpose.xlu0.b32.cont [12/16] 0.0, 128
        %650 = vxpose.xlu0.b32.cont [13/16] 0.0, 128
        %651 = vxpose.xlu0.b32.cont [14/16] 0.0, 128
        %652 = vxpose.xlu0.b32.cont [15/16] 0.0, 128
        %653 = vxpose.xlu0.b32.end [16/16] 0.0, 128
        %v654 = vpop.trf.xlu0
        %v655 = vpop.trf.xlu0
        %v656 = vpop.trf.xlu0
        %v657 = vpop.trf.xlu0
        %v658 = vpop.trf.xlu0
        %v659 = vpop.trf.xlu0
        %v660 = vpop.trf.xlu0
        %v661 = vpop.trf.xlu0
        %v662 = vpop.trf.xlu0
        %v663 = vpop.trf.xlu0
        %v664 = vpop.trf.xlu0
        %v665 = vpop.trf.xlu0
        %v666 = vpop.trf.xlu0
        %v667 = vpop.trf.xlu0
        %v668 = vpop.trf.xlu0
        %v669 = vpop.trf.xlu0
        %670 = vxpose.xlu0.b32.start [1/16] %v389, 128
        %671 = vxpose.xlu0.b32.cont [2/16] 0.0, 128
        %672 = vxpose.xlu0.b32.cont [3/16] 0.0, 128
        %673 = vxpose.xlu0.b32.cont [4/16] 0.0, 128
        %674 = vxpose.xlu0.b32.cont [5/16] 0.0, 128
        %675 = vxpose.xlu0.b32.cont [6/16] 0.0, 128
        %676 = vxpose.xlu0.b32.cont [7/16] 0.0, 128
        %677 = vxpose.xlu0.b32.cont [8/16] 0.0, 128
        %678 = vxpose.xlu0.b32.cont [9/16] 0.0, 128
        %679 = vxpose.xlu0.b32.cont [10/16] 0.0, 128
        %680 = vxpose.xlu0.b32.cont [11/16] 0.0, 128
        %681 = vxpose.xlu0.b32.cont [12/16] 0.0, 128
        %682 = vxpose.xlu0.b32.cont [13/16] 0.0, 128
        %683 = vxpose.xlu0.b32.cont [14/16] 0.0, 128
        %684 = vxpose.xlu0.b32.cont [15/16] 0.0, 128
        %685 = vxpose.xlu0.b32.end [16/16] 0.0, 128
        %v686 = vpop.trf.xlu0
        %v687 = vpop.trf.xlu0
        %v688 = vpop.trf.xlu0
        %v689 = vpop.trf.xlu0
        %v690 = vpop.trf.xlu0
        %v691 = vpop.trf.xlu0
        %v692 = vpop.trf.xlu0
        %v693 = vpop.trf.xlu0
        %v694 = vpop.trf.xlu0
        %v695 = vpop.trf.xlu0
        %v696 = vpop.trf.xlu0
        %v697 = vpop.trf.xlu0
        %v698 = vpop.trf.xlu0
        %v699 = vpop.trf.xlu0
        %v700 = vpop.trf.xlu0
        %v701 = vpop.trf.xlu0
        %702 = vxpose.xlu0.b32.start [1/16] %v407, 128
        %703 = vxpose.xlu0.b32.cont [2/16] 0.0, 128
        %704 = vxpose.xlu0.b32.cont [3/16] 0.0, 128
        %705 = vxpose.xlu0.b32.cont [4/16] 0.0, 128
        %706 = vxpose.xlu0.b32.cont [5/16] 0.0, 128
        %707 = vxpose.xlu0.b32.cont [6/16] 0.0, 128
        %708 = vxpose.xlu0.b32.cont [7/16] 0.0, 128
        %709 = vxpose.xlu0.b32.cont [8/16] 0.0, 128
        %710 = vxpose.xlu0.b32.cont [9/16] 0.0, 128
        %711 = vxpose.xlu0.b32.cont [10/16] 0.0, 128
        %712 = vxpose.xlu0.b32.cont [11/16] 0.0, 128
        %713 = vxpose.xlu0.b32.cont [12/16] 0.0, 128
        %714 = vxpose.xlu0.b32.cont [13/16] 0.0, 128
        %715 = vxpose.xlu0.b32.cont [14/16] 0.0, 128
        %716 = vxpose.xlu0.b32.cont [15/16] 0.0, 128
        %717 = vxpose.xlu0.b32.end [16/16] 0.0, 128
        %v718 = vpop.trf.xlu0
        %v719 = vpop.trf.xlu0
        %v720 = vpop.trf.xlu0
        %v721 = vpop.trf.xlu0
        %v722 = vpop.trf.xlu0
        %v723 = vpop.trf.xlu0
        %v724 = vpop.trf.xlu0
        %v725 = vpop.trf.xlu0
        %v726 = vpop.trf.xlu0
        %v727 = vpop.trf.xlu0
        %v728 = vpop.trf.xlu0
        %v729 = vpop.trf.xlu0
        %v730 = vpop.trf.xlu0
        %v731 = vpop.trf.xlu0
        %v732 = vpop.trf.xlu0
        %v733 = vpop.trf.xlu0
        %734 = vxpose.xlu0.b32.start [1/16] %v393, 128
        %735 = vxpose.xlu0.b32.cont [2/16] 0.0, 128
        %736 = vxpose.xlu0.b32.cont [3/16] 0.0, 128
        %737 = vxpose.xlu0.b32.cont [4/16] 0.0, 128
        %738 = vxpose.xlu0.b32.cont [5/16] 0.0, 128
        %739 = vxpose.xlu0.b32.cont [6/16] 0.0, 128
        %740 = vxpose.xlu0.b32.cont [7/16] 0.0, 128
        %741 = vxpose.xlu0.b32.cont [8/16] 0.0, 128
        %742 = vxpose.xlu0.b32.cont [9/16] 0.0, 128
        %743 = vxpose.xlu0.b32.cont [10/16] 0.0, 128
        %744 = vxpose.xlu0.b32.cont [11/16] 0.0, 128
        %745 = vxpose.xlu0.b32.cont [12/16] 0.0, 128
        %746 = vxpose.xlu0.b32.cont [13/16] 0.0, 128
        %747 = vxpose.xlu0.b32.cont [14/16] 0.0, 128
        %748 = vxpose.xlu0.b32.cont [15/16] 0.0, 128
        %749 = vxpose.xlu0.b32.end [16/16] 0.0, 128
        %v750 = vpop.trf.xlu0
        %v751 = vpop.trf.xlu0
        %v752 = vpop.trf.xlu0
        %v753 = vpop.trf.xlu0
        %v754 = vpop.trf.xlu0
        %v755 = vpop.trf.xlu0
        %v756 = vpop.trf.xlu0
        %v757 = vpop.trf.xlu0
        %v758 = vpop.trf.xlu0
        %v759 = vpop.trf.xlu0
        %v760 = vpop.trf.xlu0
        %v761 = vpop.trf.xlu0
        %v762 = vpop.trf.xlu0
        %v763 = vpop.trf.xlu0
        %v764 = vpop.trf.xlu0
        %v765 = vpop.trf.xlu0
        %766 = vxpose.xlu0.b32.start [1/16] %v409, 128
        %767 = vxpose.xlu0.b32.cont [2/16] 0.0, 128
        %768 = vxpose.xlu0.b32.cont [3/16] 0.0, 128
        %769 = vxpose.xlu0.b32.cont [4/16] 0.0, 128
        %770 = vxpose.xlu0.b32.cont [5/16] 0.0, 128
        %771 = vxpose.xlu0.b32.cont [6/16] 0.0, 128
        %772 = vxpose.xlu0.b32.cont [7/16] 0.0, 128
        %773 = vxpose.xlu0.b32.cont [8/16] 0.0, 128
        %774 = vxpose.xlu0.b32.cont [9/16] 0.0, 128
        %775 = vxpose.xlu0.b32.cont [10/16] 0.0, 128
        %776 = vxpose.xlu0.b32.cont [11/16] 0.0, 128
        %777 = vxpose.xlu0.b32.cont [12/16] 0.0, 128
        %778 = vxpose.xlu0.b32.cont [13/16] 0.0, 128
        %779 = vxpose.xlu0.b32.cont [14/16] 0.0, 128
        %780 = vxpose.xlu0.b32.cont [15/16] 0.0, 128
        %781 = vxpose.xlu0.b32.end [16/16] 0.0, 128
        %v782 = vpop.trf.xlu0
        %v783 = vpop.trf.xlu0
        %v784 = vpop.trf.xlu0
        %v785 = vpop.trf.xlu0
        %v786 = vpop.trf.xlu0
        %v787 = vpop.trf.xlu0
        %v788 = vpop.trf.xlu0
        %v789 = vpop.trf.xlu0
        %v790 = vpop.trf.xlu0
        %v791 = vpop.trf.xlu0
        %v792 = vpop.trf.xlu0
        %v793 = vpop.trf.xlu0
        %v794 = vpop.trf.xlu0
        %v795 = vpop.trf.xlu0
        %v796 = vpop.trf.xlu0
        %v797 = vpop.trf.xlu0
        %798 = vxpose.xlu0.b32.start [1/16] %v401, 128
        %799 = vxpose.xlu0.b32.cont [2/16] 0.0, 128
        %800 = vxpose.xlu0.b32.cont [3/16] 0.0, 128
        %801 = vxpose.xlu0.b32.cont [4/16] 0.0, 128
        %802 = vxpose.xlu0.b32.cont [5/16] 0.0, 128
        %803 = vxpose.xlu0.b32.cont [6/16] 0.0, 128
        %804 = vxpose.xlu0.b32.cont [7/16] 0.0, 128
        %805 = vxpose.xlu0.b32.cont [8/16] 0.0, 128
        %806 = vxpose.xlu0.b32.cont [9/16] 0.0, 128
        %807 = vxpose.xlu0.b32.cont [10/16] 0.0, 128
        %808 = vxpose.xlu0.b32.cont [11/16] 0.0, 128
        %809 = vxpose.xlu0.b32.cont [12/16] 0.0, 128
        %810 = vxpose.xlu0.b32.cont [13/16] 0.0, 128
        %811 = vxpose.xlu0.b32.cont [14/16] 0.0, 128
        %812 = vxpose.xlu0.b32.cont [15/16] 0.0, 128
        %813 = vxpose.xlu0.b32.end [16/16] 0.0, 128
        %v814 = vpop.trf.xlu0
        %v815 = vpop.trf.xlu0
        %v816 = vpop.trf.xlu0
        %v817 = vpop.trf.xlu0
        %v818 = vpop.trf.xlu0
        %v819 = vpop.trf.xlu0
        %v820 = vpop.trf.xlu0
        %v821 = vpop.trf.xlu0
        %v822 = vpop.trf.xlu0
        %v823 = vpop.trf.xlu0
        %v824 = vpop.trf.xlu0
        %v825 = vpop.trf.xlu0
        %v826 = vpop.trf.xlu0
        %v827 = vpop.trf.xlu0
        %v828 = vpop.trf.xlu0
        %v829 = vpop.trf.xlu0
        %830 = vxpose.xlu0.b32.start [1/16] %v411, 128
        %831 = vxpose.xlu0.b32.cont [2/16] 0.0, 128
        %832 = vxpose.xlu0.b32.cont [3/16] 0.0, 128
        %833 = vxpose.xlu0.b32.cont [4/16] 0.0, 128
        %834 = vxpose.xlu0.b32.cont [5/16] 0.0, 128
        %835 = vxpose.xlu0.b32.cont [6/16] 0.0, 128
        %836 = vxpose.xlu0.b32.cont [7/16] 0.0, 128
        %837 = vxpose.xlu0.b32.cont [8/16] 0.0, 128
        %838 = vxpose.xlu0.b32.cont [9/16] 0.0, 128
        %839 = vxpose.xlu0.b32.cont [10/16] 0.0, 128
        %840 = vxpose.xlu0.b32.cont [11/16] 0.0, 128
        %841 = vxpose.xlu0.b32.cont [12/16] 0.0, 128
        %842 = vxpose.xlu0.b32.cont [13/16] 0.0, 128
        %843 = vxpose.xlu0.b32.cont [14/16] 0.0, 128
        %844 = vxpose.xlu0.b32.cont [15/16] 0.0, 128
        %845 = vxpose.xlu0.b32.end [16/16] 0.0, 128
        %v846 = vpop.trf.xlu0
        %v847 = vpop.trf.xlu0
        %v848 = vpop.trf.xlu0
        %v849 = vpop.trf.xlu0
        %v850 = vpop.trf.xlu0
        %v851 = vpop.trf.xlu0
        %v852 = vpop.trf.xlu0
        %v853 = vpop.trf.xlu0
        %v854 = vpop.trf.xlu0
        %v855 = vpop.trf.xlu0
        %v856 = vpop.trf.xlu0
        %v857 = vpop.trf.xlu0
        %v858 = vpop.trf.xlu0
        %v859 = vpop.trf.xlu0
        %v860 = vpop.trf.xlu0
        %v861 = vpop.trf.xlu0
        %862 = vxpose.xlu0.b32.start [1/16] %v405, 128
        %863 = vxpose.xlu0.b32.cont [2/16] 0.0, 128
        %864 = vxpose.xlu0.b32.cont [3/16] 0.0, 128
        %865 = vxpose.xlu0.b32.cont [4/16] 0.0, 128
        %866 = vxpose.xlu0.b32.cont [5/16] 0.0, 128
        %867 = vxpose.xlu0.b32.cont [6/16] 0.0, 128
        %868 = vxpose.xlu0.b32.cont [7/16] 0.0, 128
        %869 = vxpose.xlu0.b32.cont [8/16] 0.0, 128
        %870 = vxpose.xlu0.b32.cont [9/16] 0.0, 128
        %871 = vxpose.xlu0.b32.cont [10/16] 0.0, 128
        %872 = vxpose.xlu0.b32.cont [11/16] 0.0, 128
        %873 = vxpose.xlu0.b32.cont [12/16] 0.0, 128
        %874 = vxpose.xlu0.b32.cont [13/16] 0.0, 128
        %875 = vxpose.xlu0.b32.cont [14/16] 0.0, 128
        %876 = vxpose.xlu0.b32.cont [15/16] 0.0, 128
        %877 = vxpose.xlu0.b32.end [16/16] 0.0, 128
        %v878 = vpop.trf.xlu0
        %v879 = vpop.trf.xlu0
        %v880 = vpop.trf.xlu0
        %v881 = vpop.trf.xlu0
        %v882 = vpop.trf.xlu0
        %v883 = vpop.trf.xlu0
        %v884 = vpop.trf.xlu0
        %v885 = vpop.trf.xlu0
        %v886 = vpop.trf.xlu0
        %v887 = vpop.trf.xlu0
        %v888 = vpop.trf.xlu0
        %v889 = vpop.trf.xlu0
        %v890 = vpop.trf.xlu0
        %v891 = vpop.trf.xlu0
        %v892 = vpop.trf.xlu0
        %v893 = vpop.trf.xlu0
        %894 = vxpose.xlu0.b32.start [1/16] %v413, 128
        %895 = vxpose.xlu0.b32.cont [2/16] 0.0, 128
        %896 = vxpose.xlu0.b32.cont [3/16] 0.0, 128
        %897 = vxpose.xlu0.b32.cont [4/16] 0.0, 128
        %898 = vxpose.xlu0.b32.cont [5/16] 0.0, 128
        %899 = vxpose.xlu0.b32.cont [6/16] 0.0, 128
        %900 = vxpose.xlu0.b32.cont [7/16] 0.0, 128
        %901 = vxpose.xlu0.b32.cont [8/16] 0.0, 128
        %902 = vxpose.xlu0.b32.cont [9/16] 0.0, 128
        %903 = vxpose.xlu0.b32.cont [10/16] 0.0, 128
        %904 = vxpose.xlu0.b32.cont [11/16] 0.0, 128
        %905 = vxpose.xlu0.b32.cont [12/16] 0.0, 128
        %906 = vxpose.xlu0.b32.cont [13/16] 0.0, 128
        %907 = vxpose.xlu0.b32.cont [14/16] 0.0, 128
        %908 = vxpose.xlu0.b32.cont [15/16] 0.0, 128
        %909 = vxpose.xlu0.b32.end [16/16] 0.0, 128
        %v910 = vpop.trf.xlu0
        %v911 = vpop.trf.xlu0
        %v912 = vpop.trf.xlu0
        %v913 = vpop.trf.xlu0
        %v914 = vpop.trf.xlu0
        %v915 = vpop.trf.xlu0
        %v916 = vpop.trf.xlu0
        %v917 = vpop.trf.xlu0
        %v918 = vpop.trf.xlu0
        %v919 = vpop.trf.xlu0
        %v920 = vpop.trf.xlu0
        %v921 = vpop.trf.xlu0
        %v922 = vpop.trf.xlu0
        %v923 = vpop.trf.xlu0
        %v924 = vpop.trf.xlu0
        %v925 = vpop.trf.xlu0
        %v926 = vrot.slane %v494, 4
        %v927 = vsel %vm302, %v926, %v430
        %v928 = vrot.slane %v430, 4
        %v929 = vsel %vm302, %v494, %v928
        %v931 = vunpack.c.l.s4 1983009808
        %v932 = vunpack.c.0.s8 %v931
        %v933 = vperm.slane %v927, %v932
        %v935 = vunpack.c.l.s4 1983009808
        %v936 = vunpack.c.0.s8 %v935
        %v937 = vperm.slane %v929, %v936
        %v938 = vrot.slane %v526, 4
        %v939 = vsel %vm302, %v938, %v462
        %v940 = vrot.slane %v462, 4
        %v941 = vsel %vm302, %v526, %v940
        %v943 = vunpack.c.l.s4 1983009808
        %v944 = vunpack.c.0.s8 %v943
        %v945 = vperm.slane %v939, %v944
        %v947 = vunpack.c.l.s4 1983009808
        %v948 = vunpack.c.0.s8 %v947
        %v949 = vperm.slane %v941, %v948
        %v950 = vrot.slane %v622, 4
        %v951 = vsel %vm302, %v950, %v558
        %v952 = vrot.slane %v558, 4
        %v953 = vsel %vm302, %v622, %v952
        %v955 = vunpack.c.l.s4 1983009808
        %v956 = vunpack.c.0.s8 %v955
        %v957 = vperm.slane %v951, %v956
        %v959 = vunpack.c.l.s4 1983009808
        %v960 = vunpack.c.0.s8 %v959
        %v961 = vperm.slane %v953, %v960
        %v962 = vrot.slane %v654, 4
        %v963 = vsel %vm302, %v962, %v590
        %v964 = vrot.slane %v590, 4
        %v965 = vsel %vm302, %v654, %v964
        %v967 = vunpack.c.l.s4 1983009808
        %v968 = vunpack.c.0.s8 %v967
        %v969 = vperm.slane %v963, %v968
        %v971 = vunpack.c.l.s4 1983009808
        %v972 = vunpack.c.0.s8 %v971
        %v973 = vperm.slane %v965, %v972
        %v974 = vrot.slane %v945, 4
        %v975 = vsel %vm302, %v974, %v933
        %v976 = vrot.slane %v933, 4
        %v977 = vsel %vm302, %v945, %v976
        %v979 = vunpack.c.l.s4 1934713408
        %v980 = vunpack.c.0.s8 %v979
        %v981 = vperm.slane %v975, %v980
        %v983 = vunpack.c.l.s4 1934713408
        %v984 = vunpack.c.0.s8 %v983
        %v985 = vperm.slane %v977, %v984
        %v986 = vrot.slane %v949, 4
        %v987 = vsel %vm302, %v986, %v937
        %v988 = vrot.slane %v937, 4
        %v989 = vsel %vm302, %v949, %v988
        %v991 = vunpack.c.l.s4 1934713408
        %v992 = vunpack.c.0.s8 %v991
        %v993 = vperm.slane %v987, %v992
        %v995 = vunpack.c.l.s4 1934713408
        %v996 = vunpack.c.0.s8 %v995
        %v997 = vperm.slane %v989, %v996
        %v998 = vrot.slane %v969, 4
        %v999 = vsel %vm302, %v998, %v957
        %v1000 = vrot.slane %v957, 4
        %v1001 = vsel %vm302, %v969, %v1000
        %v1003 = vunpack.c.l.s4 1934713408
        %v1004 = vunpack.c.0.s8 %v1003
        %v1005 = vperm.slane %v999, %v1004
        %v1007 = vunpack.c.l.s4 1934713408
        %v1008 = vunpack.c.0.s8 %v1007
        %v1009 = vperm.slane %v1001, %v1008
        %v1010 = vrot.slane %v973, 4
        %v1011 = vsel %vm302, %v1010, %v961
        %v1012 = vrot.slane %v961, 4
        %v1013 = vsel %vm302, %v973, %v1012
        %v1015 = vunpack.c.l.s4 1934713408
        %v1016 = vunpack.c.0.s8 %v1015
        %v1017 = vperm.slane %v1011, %v1016
        %v1019 = vunpack.c.l.s4 1934713408
        %v1020 = vunpack.c.0.s8 %v1019
        %v1021 = vperm.slane %v1013, %v1020
        %v1022 = vrot.slane %v1005, 4
        %v1023 = vsel %vm302, %v1022, %v981
        %v1024 = vrot.slane %v981, 4
        %v1025 = vsel %vm302, %v1005, %v1024
        %v1026 = vrot.slane %v1009, 4
        %v1027 = vsel %vm302, %v1026, %v985
        %v1028 = vrot.slane %v985, 4
        %v1029 = vsel %vm302, %v1009, %v1028
        %v1030 = vrot.slane %v1017, 4
        %v1031 = vsel %vm302, %v1030, %v993
        %v1032 = vrot.slane %v993, 4
        %v1033 = vsel %vm302, %v1017, %v1032
        %v1034 = vrot.slane %v1021, 4
        %v1035 = vsel %vm302, %v1034, %v997
        %v1036 = vrot.slane %v997, 4
        %v1037 = vsel %vm302, %v1021, %v1036
        %v1038 = vrot.slane %v750, 4
        %v1039 = vsel %vm302, %v1038, %v686
        %v1040 = vrot.slane %v686, 4
        %v1041 = vsel %vm302, %v750, %v1040
        %v1043 = vunpack.c.l.s4 1983009808
        %v1044 = vunpack.c.0.s8 %v1043
        %v1045 = vperm.slane %v1039, %v1044
        %v1047 = vunpack.c.l.s4 1983009808
        %v1048 = vunpack.c.0.s8 %v1047
        %v1049 = vperm.slane %v1041, %v1048
        %v1050 = vrot.slane %v782, 4
        %v1051 = vsel %vm302, %v1050, %v718
        %v1052 = vrot.slane %v718, 4
        %v1053 = vsel %vm302, %v782, %v1052
        %v1055 = vunpack.c.l.s4 1983009808
        %v1056 = vunpack.c.0.s8 %v1055
        %v1057 = vperm.slane %v1051, %v1056
        %v1059 = vunpack.c.l.s4 1983009808
        %v1060 = vunpack.c.0.s8 %v1059
        %v1061 = vperm.slane %v1053, %v1060
        %v1062 = vrot.slane %v878, 4
        %v1063 = vsel %vm302, %v1062, %v814
        %v1064 = vrot.slane %v814, 4
        %v1065 = vsel %vm302, %v878, %v1064
        %v1067 = vunpack.c.l.s4 1983009808
        %v1068 = vunpack.c.0.s8 %v1067
        %v1069 = vperm.slane %v1063, %v1068
        %v1071 = vunpack.c.l.s4 1983009808
        %v1072 = vunpack.c.0.s8 %v1071
        %v1073 = vperm.slane %v1065, %v1072
        %v1074 = vrot.slane %v910, 4
        %v1075 = vsel %vm302, %v1074, %v846
        %v1076 = vrot.slane %v846, 4
        %v1077 = vsel %vm302, %v910, %v1076
        %v1079 = vunpack.c.l.s4 1983009808
        %v1080 = vunpack.c.0.s8 %v1079
        %v1081 = vperm.slane %v1075, %v1080
        %v1083 = vunpack.c.l.s4 1983009808
        %v1084 = vunpack.c.0.s8 %v1083
        %v1085 = vperm.slane %v1077, %v1084
        %v1086 = vrot.slane %v1057, 4
        %v1087 = vsel %vm302, %v1086, %v1045
        %v1088 = vrot.slane %v1045, 4
        %v1089 = vsel %vm302, %v1057, %v1088
        %v1091 = vunpack.c.l.s4 1934713408
        %v1092 = vunpack.c.0.s8 %v1091
        %v1093 = vperm.slane %v1087, %v1092
        %v1095 = vunpack.c.l.s4 1934713408
        %v1096 = vunpack.c.0.s8 %v1095
        %v1097 = vperm.slane %v1089, %v1096
        %v1098 = vrot.slane %v1061, 4
        %v1099 = vsel %vm302, %v1098, %v1049
        %v1100 = vrot.slane %v1049, 4
        %v1101 = vsel %vm302, %v1061, %v1100
        %v1103 = vunpack.c.l.s4 1934713408
        %v1104 = vunpack.c.0.s8 %v1103
        %v1105 = vperm.slane %v1099, %v1104
        %v1107 = vunpack.c.l.s4 1934713408
        %v1108 = vunpack.c.0.s8 %v1107
        %v1109 = vperm.slane %v1101, %v1108
        %v1110 = vrot.slane %v1081, 4
        %v1111 = vsel %vm302, %v1110, %v1069
        %v1112 = vrot.slane %v1069, 4
        %v1113 = vsel %vm302, %v1081, %v1112
        %v1115 = vunpack.c.l.s4 1934713408
        %v1116 = vunpack.c.0.s8 %v1115
        %v1117 = vperm.slane %v1111, %v1116
        %v1119 = vunpack.c.l.s4 1934713408
        %v1120 = vunpack.c.0.s8 %v1119
        %v1121 = vperm.slane %v1113, %v1120
        %v1122 = vrot.slane %v1085, 4
        %v1123 = vsel %vm302, %v1122, %v1073
        %v1124 = vrot.slane %v1073, 4
        %v1125 = vsel %vm302, %v1085, %v1124
        %v1127 = vunpack.c.l.s4 1934713408
        %v1128 = vunpack.c.0.s8 %v1127
        %v1129 = vperm.slane %v1123, %v1128
        %v1131 = vunpack.c.l.s4 1934713408
        %v1132 = vunpack.c.0.s8 %v1131
        %v1133 = vperm.slane %v1125, %v1132
        %v1134 = vrot.slane %v1117, 4
        %v1135 = vsel %vm302, %v1134, %v1093
        %v1136 = vrot.slane %v1093, 4
        %v1137 = vsel %vm302, %v1117, %v1136
        %v1138 = vrot.slane %v1121, 4
        %v1139 = vsel %vm302, %v1138, %v1097
        %v1140 = vrot.slane %v1097, 4
        %v1141 = vsel %vm302, %v1121, %v1140
        %v1142 = vrot.slane %v1129, 4
        %v1143 = vsel %vm302, %v1142, %v1105
        %v1144 = vrot.slane %v1105, 4
        %v1145 = vsel %vm302, %v1129, %v1144
        %v1146 = vrot.slane %v1133, 4
        %v1147 = vsel %vm302, %v1146, %v1109
        %v1148 = vrot.slane %v1109, 4
        %v1149 = vsel %vm302, %v1133, %v1148
        %v1150 = vrot.slane %v495, 4
        %v1151 = vsel %vm302, %v1150, %v431
        %v1152 = vrot.slane %v431, 4
        %v1153 = vsel %vm302, %v495, %v1152
        %v1155 = vunpack.c.l.s4 1983009808
        %v1156 = vunpack.c.0.s8 %v1155
        %v1157 = vperm.slane %v1151, %v1156
        %v1159 = vunpack.c.l.s4 1983009808
        %v1160 = vunpack.c.0.s8 %v1159
        %v1161 = vperm.slane %v1153, %v1160
        %v1162 = vrot.slane %v527, 4
        %v1163 = vsel %vm302, %v1162, %v463
        %v1164 = vrot.slane %v463, 4
        %v1165 = vsel %vm302, %v527, %v1164
        %v1167 = vunpack.c.l.s4 1983009808
        %v1168 = vunpack.c.0.s8 %v1167
        %v1169 = vperm.slane %v1163, %v1168
        %v1171 = vunpack.c.l.s4 1983009808
        %v1172 = vunpack.c.0.s8 %v1171
        %v1173 = vperm.slane %v1165, %v1172
        %v1174 = vrot.slane %v623, 4
        %v1175 = vsel %vm302, %v1174, %v559
        %v1176 = vrot.slane %v559, 4
        %v1177 = vsel %vm302, %v623, %v1176
        %v1179 = vunpack.c.l.s4 1983009808
        %v1180 = vunpack.c.0.s8 %v1179
        %v1181 = vperm.slane %v1175, %v1180
        %v1183 = vunpack.c.l.s4 1983009808
        %v1184 = vunpack.c.0.s8 %v1183
        %v1185 = vperm.slane %v1177, %v1184
        %v1186 = vrot.slane %v655, 4
        %v1187 = vsel %vm302, %v1186, %v591
        %v1188 = vrot.slane %v591, 4
        %v1189 = vsel %vm302, %v655, %v1188
        %v1191 = vunpack.c.l.s4 1983009808
        %v1192 = vunpack.c.0.s8 %v1191
        %v1193 = vperm.slane %v1187, %v1192
        %v1195 = vunpack.c.l.s4 1983009808
        %v1196 = vunpack.c.0.s8 %v1195
        %v1197 = vperm.slane %v1189, %v1196
        %v1198 = vrot.slane %v1169, 4
        %v1199 = vsel %vm302, %v1198, %v1157
        %v1200 = vrot.slane %v1157, 4
        %v1201 = vsel %vm302, %v1169, %v1200
        %v1203 = vunpack.c.l.s4 1934713408
        %v1204 = vunpack.c.0.s8 %v1203
        %v1205 = vperm.slane %v1199, %v1204
        %v1207 = vunpack.c.l.s4 1934713408
        %v1208 = vunpack.c.0.s8 %v1207
        %v1209 = vperm.slane %v1201, %v1208
        %v1210 = vrot.slane %v1173, 4
        %v1211 = vsel %vm302, %v1210, %v1161
        %v1212 = vrot.slane %v1161, 4
        %v1213 = vsel %vm302, %v1173, %v1212
        %v1215 = vunpack.c.l.s4 1934713408
        %v1216 = vunpack.c.0.s8 %v1215
        %v1217 = vperm.slane %v1211, %v1216
        %v1219 = vunpack.c.l.s4 1934713408
        %v1220 = vunpack.c.0.s8 %v1219
        %v1221 = vperm.slane %v1213, %v1220
        %v1222 = vrot.slane %v1193, 4
        %v1223 = vsel %vm302, %v1222, %v1181
        %v1224 = vrot.slane %v1181, 4
        %v1225 = vsel %vm302, %v1193, %v1224
        %v1227 = vunpack.c.l.s4 1934713408
        %v1228 = vunpack.c.0.s8 %v1227
        %v1229 = vperm.slane %v1223, %v1228
        %v1231 = vunpack.c.l.s4 1934713408
        %v1232 = vunpack.c.0.s8 %v1231
        %v1233 = vperm.slane %v1225, %v1232
        %v1234 = vrot.slane %v1197, 4
        %v1235 = vsel %vm302, %v1234, %v1185
        %v1236 = vrot.slane %v1185, 4
        %v1237 = vsel %vm302, %v1197, %v1236
        %v1239 = vunpack.c.l.s4 1934713408
        %v1240 = vunpack.c.0.s8 %v1239
        %v1241 = vperm.slane %v1235, %v1240
        %v1243 = vunpack.c.l.s4 1934713408
        %v1244 = vunpack.c.0.s8 %v1243
        %v1245 = vperm.slane %v1237, %v1244
        %v1246 = vrot.slane %v1229, 4
        %v1247 = vsel %vm302, %v1246, %v1205
        %v1248 = vrot.slane %v1205, 4
        %v1249 = vsel %vm302, %v1229, %v1248
        %v1250 = vrot.slane %v1233, 4
        %v1251 = vsel %vm302, %v1250, %v1209
        %v1252 = vrot.slane %v1209, 4
        %v1253 = vsel %vm302, %v1233, %v1252
        %v1254 = vrot.slane %v1241, 4
        %v1255 = vsel %vm302, %v1254, %v1217
        %v1256 = vrot.slane %v1217, 4
        %v1257 = vsel %vm302, %v1241, %v1256
        %v1258 = vrot.slane %v1245, 4
        %v1259 = vsel %vm302, %v1258, %v1221
        %v1260 = vrot.slane %v1221, 4
        %v1261 = vsel %vm302, %v1245, %v1260
        %v1262 = vrot.slane %v751, 4
        %v1263 = vsel %vm302, %v1262, %v687
        %v1264 = vrot.slane %v687, 4
        %v1265 = vsel %vm302, %v751, %v1264
        %v1267 = vunpack.c.l.s4 1983009808
        %v1268 = vunpack.c.0.s8 %v1267
        %v1269 = vperm.slane %v1263, %v1268
        %v1271 = vunpack.c.l.s4 1983009808
        %v1272 = vunpack.c.0.s8 %v1271
        %v1273 = vperm.slane %v1265, %v1272
        %v1274 = vrot.slane %v783, 4
        %v1275 = vsel %vm302, %v1274, %v719
        %v1276 = vrot.slane %v719, 4
        %v1277 = vsel %vm302, %v783, %v1276
        %v1279 = vunpack.c.l.s4 1983009808
        %v1280 = vunpack.c.0.s8 %v1279
        %v1281 = vperm.slane %v1275, %v1280
        %v1283 = vunpack.c.l.s4 1983009808
        %v1284 = vunpack.c.0.s8 %v1283
        %v1285 = vperm.slane %v1277, %v1284
        %v1286 = vrot.slane %v879, 4
        %v1287 = vsel %vm302, %v1286, %v815
        %v1288 = vrot.slane %v815, 4
        %v1289 = vsel %vm302, %v879, %v1288
        %v1291 = vunpack.c.l.s4 1983009808
        %v1292 = vunpack.c.0.s8 %v1291
        %v1293 = vperm.slane %v1287, %v1292
        %v1295 = vunpack.c.l.s4 1983009808
        %v1296 = vunpack.c.0.s8 %v1295
        %v1297 = vperm.slane %v1289, %v1296
        %v1298 = vrot.slane %v911, 4
        %v1299 = vsel %vm302, %v1298, %v847
        %v1300 = vrot.slane %v847, 4
        %v1301 = vsel %vm302, %v911, %v1300
        %v1303 = vunpack.c.l.s4 1983009808
        %v1304 = vunpack.c.0.s8 %v1303
        %v1305 = vperm.slane %v1299, %v1304
        %v1307 = vunpack.c.l.s4 1983009808
        %v1308 = vunpack.c.0.s8 %v1307
        %v1309 = vperm.slane %v1301, %v1308
        %v1310 = vrot.slane %v1281, 4
        %v1311 = vsel %vm302, %v1310, %v1269
        %v1312 = vrot.slane %v1269, 4
        %v1313 = vsel %vm302, %v1281, %v1312
        %v1315 = vunpack.c.l.s4 1934713408
        %v1316 = vunpack.c.0.s8 %v1315
        %v1317 = vperm.slane %v1311, %v1316
        %v1319 = vunpack.c.l.s4 1934713408
        %v1320 = vunpack.c.0.s8 %v1319
        %v1321 = vperm.slane %v1313, %v1320
        %v1322 = vrot.slane %v1285, 4
        %v1323 = vsel %vm302, %v1322, %v1273
        %v1324 = vrot.slane %v1273, 4
        %v1325 = vsel %vm302, %v1285, %v1324
        %v1327 = vunpack.c.l.s4 1934713408
        %v1328 = vunpack.c.0.s8 %v1327
        %v1329 = vperm.slane %v1323, %v1328
        %v1331 = vunpack.c.l.s4 1934713408
        %v1332 = vunpack.c.0.s8 %v1331
        %v1333 = vperm.slane %v1325, %v1332
        %v1334 = vrot.slane %v1305, 4
        %v1335 = vsel %vm302, %v1334, %v1293
        %v1336 = vrot.slane %v1293, 4
        %v1337 = vsel %vm302, %v1305, %v1336
        %v1339 = vunpack.c.l.s4 1934713408
        %v1340 = vunpack.c.0.s8 %v1339
        %v1341 = vperm.slane %v1335, %v1340
        %v1343 = vunpack.c.l.s4 1934713408
        %v1344 = vunpack.c.0.s8 %v1343
        %v1345 = vperm.slane %v1337, %v1344
        %v1346 = vrot.slane %v1309, 4
        %v1347 = vsel %vm302, %v1346, %v1297
        %v1348 = vrot.slane %v1297, 4
        %v1349 = vsel %vm302, %v1309, %v1348
        %v1351 = vunpack.c.l.s4 1934713408
        %v1352 = vunpack.c.0.s8 %v1351
        %v1353 = vperm.slane %v1347, %v1352
        %v1355 = vunpack.c.l.s4 1934713408
        %v1356 = vunpack.c.0.s8 %v1355
        %v1357 = vperm.slane %v1349, %v1356
        %v1358 = vrot.slane %v1341, 4
        %v1359 = vsel %vm302, %v1358, %v1317
        %v1360 = vrot.slane %v1317, 4
        %v1361 = vsel %vm302, %v1341, %v1360
        %v1362 = vrot.slane %v1345, 4
        %v1363 = vsel %vm302, %v1362, %v1321
        %v1364 = vrot.slane %v1321, 4
        %v1365 = vsel %vm302, %v1345, %v1364
        %v1366 = vrot.slane %v1353, 4
        %v1367 = vsel %vm302, %v1366, %v1329
        %v1368 = vrot.slane %v1329, 4
        %v1369 = vsel %vm302, %v1353, %v1368
        %v1370 = vrot.slane %v1357, 4
        %v1371 = vsel %vm302, %v1370, %v1333
        %v1372 = vrot.slane %v1333, 4
        %v1373 = vsel %vm302, %v1357, %v1372
        %vm1374 = vcmask 31744
        %1375 = vst.msk [vmem:[%s164] sm:$0xff] %vm1374, %v1023
        %1376 = vst.msk [vmem:[%s164 + $0x8] sm:$0xff] %vm1374, %v1135
        %1377 = vst.msk [vmem:[%s164 + $0x10] sm:$0xff] %vm1374, %v1025
        %1378 = vst.msk [vmem:[%s164 + $0x18] sm:$0xff] %vm1374, %v1137
        %1379 = vst.msk [vmem:[%s164 + $0x20] sm:$0xff] %vm1374, %v1027
        %1380 = vst.msk [vmem:[%s164 + $0x28] sm:$0xff] %vm1374, %v1139
        %1381 = vst.msk [vmem:[%s164 + $0x30] sm:$0xff] %vm1374, %v1029
        %1382 = vst.msk [vmem:[%s164 + $0x38] sm:$0xff] %vm1374, %v1141
        %1383 = vst.msk [vmem:[%s164 + $0x40] sm:$0xff] %vm1374, %v1031
        %1384 = vst.msk [vmem:[%s164 + $0x48] sm:$0xff] %vm1374, %v1143
        %1385 = vst.msk [vmem:[%s164 + $0x50] sm:$0xff] %vm1374, %v1033
        %1386 = vst.msk [vmem:[%s164 + $0x58] sm:$0xff] %vm1374, %v1145
        %1387 = vst.msk [vmem:[%s164 + $0x60] sm:$0xff] %vm1374, %v1035
        %1388 = vst.msk [vmem:[%s164 + $0x68] sm:$0xff] %vm1374, %v1147
        %1389 = vst.msk [vmem:[%s164 + $0x70] sm:$0xff] %vm1374, %v1037
        %1390 = vst.msk [vmem:[%s164 + $0x78] sm:$0xff] %vm1374, %v1149
        %1391 = vst.msk [vmem:[%s164 + $0x80] sm:$0xff] %vm1374, %v1247
        %1392 = vst.msk [vmem:[%s164 + $0x88] sm:$0xff] %vm1374, %v1359
        %1393 = vst.msk [vmem:[%s164 + $0x90] sm:$0xff] %vm1374, %v1249
        %1394 = vst.msk [vmem:[%s164 + $0x98] sm:$0xff] %vm1374, %v1361
        %1395 = vst.msk [vmem:[%s164 + $0xa0] sm:$0xff] %vm1374, %v1251
        %1396 = vst.msk [vmem:[%s164 + $0xa8] sm:$0xff] %vm1374, %v1363
        %1397 = vst.msk [vmem:[%s164 + $0xb0] sm:$0xff] %vm1374, %v1253
        %1398 = vst.msk [vmem:[%s164 + $0xb8] sm:$0xff] %vm1374, %v1365
        %1399 = vst.msk [vmem:[%s164 + $0xc0] sm:$0xff] %vm1374, %v1255
        %1400 = vst.msk [vmem:[%s164 + $0xc8] sm:$0xff] %vm1374, %v1367
        %1401 = vst.msk [vmem:[%s164 + $0xd0] sm:$0xff] %vm1374, %v1257
        %1402 = vst.msk [vmem:[%s164 + $0xd8] sm:$0xff] %vm1374, %v1369
        %1403 = vst.msk [vmem:[%s164 + $0xe0] sm:$0xff] %vm1374, %v1259
        %1404 = vst.msk [vmem:[%s164 + $0xe8] sm:$0xff] %vm1374, %v1371
        %1405 = vst.msk [vmem:[%s164 + $0xf0] sm:$0xff] %vm1374, %v1261
        %1406 = vst.msk [vmem:[%s164 + $0xf8] sm:$0xff] %vm1374, %v1373
        %p1407 = scmp.lt.s32.totalorder %s19, 1
        %s1408 = scalar_select %p1407, %s19, 1
        %p1409 = scmp.lt.s32.totalorder %s20, 0
        %s1410 = scalar_select %p1409, %s20, 0
        %s1411 = smul.addr %s1408, 32
        %s1412 = sadd.s32 %s1410, %s1411
        %s1413 = smul.addr %s1412, 8
        %s1414 = scalar_lea.vmem %s1, %s1413
        // Predicated region
        $region29: #{tpu_custom_call.1} parent=23 // pred_check
          %p1415 = pneg %p75
        $region30: #{tpu_custom_call.1} parent=23 // pred_check_branch
          %1417 = sbr.rel (%p1415) target = $region32
        $region31: #{tpu_custom_call.1} parent=23 // pred_region
          _
        $region32: #{tpu_custom_call.1} parent=23 // pred_fallthru
          _
      $region24: #{tpu_custom_call.1} parent=5 // pred_fallthru
        _
      %p1418 = scmp.le.s32.totalorder 2, %s10
      // Predicated region
      $region33: #{tpu_custom_call.1} parent=5 // pred_check
        %p1419 = pneg %p1418
      $region34: #{tpu_custom_call.1} parent=5 // pred_check_branch
        %1421 = sbr.rel (%p1419) target = $region36
      $region35: #{tpu_custom_call.1} parent=5 // pred_region
        %s1422 = ssub.s32 %s10, 2
        // Predicated region
        $region37: #{tpu_custom_call.1} parent=35 // pred_check
          %p1423 = pneg %p81
        $region38: #{tpu_custom_call.1} parent=35 // pred_check_branch
          %1425 = sbr.rel (%p1423) target = $region40
        $region39: #{tpu_custom_call.1} parent=35 // pred_region
          %p1426 = scmp.lt.s32.totalorder %s21, 1
          %s1427 = scalar_select %p1426, %s21, 1
          %p1428 = scmp.lt.s32.totalorder %s22, 0
          %s1429 = scalar_select %p1428, %s22, 0
          %s1430 = smul.addr %s1427, 32
          %s1431 = sadd.s32 %s1429, %s1430
          %s1432 = smul.addr %s1431, 8
          %s1433 = scalar_lea.vmem %s1, %s1432
        $region40: #{tpu_custom_call.1} parent=35 // pred_fallthru
          _
      $region36: #{tpu_custom_call.1} parent=5 // pred_fallthru
        _
    $region6: #{tpu_custom_call.1} parent=1 // loop_footer
      %s14 = sadd.s32 1, %s10
    $region7: #{tpu_custom_call.1} parent=1 // loop_footer_branch
      %9 = sbr.rel target = $region3
    $region8: #{tpu_custom_call.1} parent=1 // loop_exit
      _
    %1434 = vsyncpa [#allocation3], 1
    %s1435 = scalar_lea.sflag [#allocation3], 1
    %1436 = vsyncpa %s1435, 1

</llo_original>
